<compile_context>
chip_gen: v7x
topology: tpu7x:2x2x1
jax: 0.10.0
libtpu: 0.0.40
codegen_flags: <defaults>
</compile_context>

<pallas_src>
import jax
import jax.numpy as jnp
from jax.experimental import pallas as pl
from jax.experimental.pallas import tpu as pltpu


def _pooler_kernel(x_ref, w_ref, b_ref, o_ref):
    # x_ref: (TM, H)  token-0 activations (input dtype)
    # w_ref: (H, H)   dense weight, pre-transposed to [in, out], bf16
    # b_ref: (1, H)   dense bias, f32
    # o_ref: (TM, H)  pooled output
    x = x_ref[...]
    if x.dtype != w_ref.dtype:          # trace-time branch; no-op for bf16 inputs
        x = x.astype(w_ref.dtype)       # bf16 feed for the MXU
    # Native-layout contraction: x[TM,H] @ w[H,H] with f32 accumulation (MXU).
    y = jnp.dot(x, w_ref[...], preferred_element_type=jnp.float32)
    y = y + b_ref[...]                  # VPU broadcast add, f32
    o_ref[...] = jnp.tanh(y).astype(o_ref.dtype)   # EUP tanh in f32, cast on store


def prepare_pooler_params(weight, bias, *, mxu_dtype=jnp.bfloat16):
    """One-time parameter preparation (do at load time, NOT per forward call).

    weight: [H, H] in PyTorch nn.Linear (out, in) layout.
    Returns (w_t, b2): weight transposed to [in, out] in the MXU feed dtype,
    bias as f32 [1, H] (the epilogue dtype).
    """
    # TODO(synk): optional fp8 (v7x) / int8 (v6e) weight path with a dequant
    # scale in the epilogue for the weight-HBM-bound small-batch regime.
    w_t = jnp.asarray(weight).T.astype(mxu_dtype)            # [in, out]
    b2 = jnp.asarray(bias).astype(jnp.float32).reshape(1, -1)
    return w_t, b2


def _resident_block_spec(block_shape, index_map):
    # Block-invariant operand: a single VMEM buffer suffices (constant index
    # map => no prefetch double-buffer). Fall back cleanly if this JAX build
    # does not expose pipeline_mode / pl.Buffered.
    try:
        return pl.BlockSpec(block_shape, index_map, pipeline_mode=pl.Buffered(1))
    except (TypeError, AttributeError):
        return pl.BlockSpec(block_shape, index_map)


def _choose_tm(B, H, tm_max):
    """Batch-tile size.

    Small B (activation traffic << H^2 weight read): one tile / one grid step,
    so the weight is DMA'd exactly once and no TC duplicates it.
    Larger B: an even number of tiles (balances v7x's 2 TensorCores), each a
    multiple of 8 sublanes and at most tm_max.
    """
    if B * 4 <= H or B <= 8:
        return B
    n_tiles = max(2, -(-B // tm_max))
    if n_tiles % 2:
        n_tiles += 1                      # even tile count for 2-TC balance
    tm = -(-B // n_tiles)
    tm = -(-tm // 8) * 8                  # round up to a sublane multiple
    return min(tm, tm_max)


def bert_pooler(hidden_states, w_t, bias2, *, out_dtype=None, tm_max=512):
    """hidden_states: [B, S, H]; w_t: [H, H] pre-transposed ([in, out], bf16);
    bias2: [1, H] f32 (both from prepare_pooler_params)."""
    B, S, H = hidden_states.shape
    out_dtype = hidden_states.dtype if out_dtype is None else out_dtype

    tm = _choose_tm(B, H, tm_max)
    grid = (pl.cdiv(B, tm),)

    if H % 128 == 0:
        # Free (metadata-only) reshape of the contiguous [B, S, H] buffer;
        # token 0's features are columns [0, H) of each row, so the input DMA
        # reads token 0 straight out of HBM -- no separate slice intermediate.
        x2 = hidden_states.reshape(B, S * H)
    else:
        # Fallback for lane-unaligned H (not the BERT case): slice in JAX.
        x2 = hidden_states[:, 0, :]
    x_spec = pl.BlockSpec((tm, H), lambda i: (i, 0))

    x_itemsize = jnp.dtype(hidden_states.dtype).itemsize
    o_itemsize = jnp.dtype(out_dtype).itemsize
    w_itemsize = jnp.dtype(w_t.dtype).itemsize

    cost = pl.CostEstimate(
        flops=2 * B * H * H,
        transcendentals=B * H,
        bytes_accessed=(B * H * x_itemsize       # token-0 activations
                        + H * H * w_itemsize     # weight (once; 2x under 2-TC sharding)
                        + H * 4                  # bias
                        + B * H * o_itemsize),   # output
    )

    # Explicit scoped-VMEM limit: weight single-buffered, x/out double-buffered.
    # v5e's default scoped limit is 16 MiB; be explicit so tm=512 fits there.
    vmem_need = (H * H * w_itemsize
                 + 2 * H * 4
                 + 2 * tm * H * x_itemsize
                 + 2 * tm * H * o_itemsize)
    vmem_limit = int(min(max(2 * vmem_need + (1 << 20), 32 << 20), 48 << 20))

    return pl.pallas_call(
        _pooler_kernel,
        out_shape=jax.ShapeDtypeStruct((B, H), out_dtype),
        grid_spec=pltpu.PrefetchScalarGridSpec(
            num_scalar_prefetch=0,
            grid=grid,
            in_specs=[
                x_spec,                                           # pipelined batch tiles
                _resident_block_spec((H, H), lambda i: (0, 0)),   # weight, VMEM-resident
                _resident_block_spec((1, H), lambda i: (0, 0)),   # bias, VMEM-resident
            ],
            out_specs=pl.BlockSpec((tm, H), lambda i: (i, 0)),
        ),
        compiler_params=pltpu.CompilerParams(
            dimension_semantics=("parallel",),   # v7x: shard batch tiles over 2 TCs
            vmem_limit_bytes=vmem_limit,
        ),
        cost_estimate=cost,
    )(x2, w_t, bias2)


if __name__ == "__main__":
    # Small shapes consistent with the module; H kept lane-aligned (128) so the
    # fused token-0 read path is exercised (real BERT H=768/1024 is 128-aligned).
    B, S, H = 2, 8, 128
    key = jax.random.PRNGKey(0)
    k_x, k_w, k_b = jax.random.split(key, 3)

    hidden_states = jax.random.normal(k_x, (B, S, H), dtype=jnp.float32)
    # nn.Linear(hidden_size, hidden_size): weight (out, in), bias (out,)
    weight = jax.random.normal(k_w, (H, H), dtype=jnp.float32) * 0.02
    bias = jax.random.normal(k_b, (H,), dtype=jnp.float32) * 0.02

    # One-time parameter prep (load time), then the hot-path call.
    w_t, b2 = prepare_pooler_params(weight, bias)
    pooled = bert_pooler(hidden_states, w_t, b2)
    jax.block_until_ready(pooled)

    # Reference: pure-JAX semantics of the PyTorch module. Tolerance loosened
    # slightly to account for the bf16 MXU feed (f32 accumulation/epilogue).
    ref = jnp.tanh(hidden_states[:, 0, :] @ weight.T + bias)
    assert pooled.shape == (B, H)
    assert jnp.allclose(pooled, ref, atol=1e-2, rtol=1e-2), float(
        jnp.max(jnp.abs(pooled - ref)))

    print("KERNEL_OK")
</pallas_src>

<mosaic_0001>
module attributes {stable_mosaic.version = 11 : i64} {
  func.func @_pooler_kernel(%arg0: i32, %arg1: memref<2x128xf32, #tpu.memory_space<vmem>>, %arg2: memref<128x128xbf16, #tpu.memory_space<vmem>>, %arg3: memref<1x128xf32, #tpu.memory_space<vmem>>, %arg4: memref<2x128xf32, #tpu.memory_space<vmem>>) attributes {dimension_semantics = [#tpu.dimension_semantics<parallel>], iteration_bounds = array<i64: 1>, scalar_prefetch = 0 : i64, scratch_operands = 0 : i64, tpu.core_type = #tpu.core_type<tc>, window_params = [{transform_indices = @transform_0, window_bounds = array<i64: 2, 128>}, {pipeline_mode = #tpu.pipeline_mode<synchronous>, transform_indices = @transform_1, window_bounds = array<i64: 128, 128>}, {pipeline_mode = #tpu.pipeline_mode<synchronous>, transform_indices = @transform_2, window_bounds = array<i64: 1, 128>}, {transform_indices = @transform_3, window_bounds = array<i64: 2, 128>}]} {
    %c0 = arith.constant 0 : index
    %c0_0 = arith.constant 0 : index
    %0 = vector.load %arg1[%c0, %c0_0] : memref<2x128xf32, #tpu.memory_space<vmem>>, vector<2x128xf32>
    %1 = arith.truncf %0 : vector<2x128xf32> to vector<2x128xbf16>
    %c0_1 = arith.constant 0 : index
    %c0_2 = arith.constant 0 : index
    %2 = vector.load %arg2[%c0_1, %c0_2] : memref<128x128xbf16, #tpu.memory_space<vmem>>, vector<128x128xbf16>
    %cst = arith.constant dense<0.000000e+00> : vector<2x128xf32>
    %3 = tpu.matmul %1, %2, %cst {dimension_numbers = #tpu.dot_dimension_numbers<[1], [0], [0], [1], [0, 0, 1, 1], [], []>} : vector<2x128xbf16>, vector<128x128xbf16>, vector<2x128xf32> -> vector<2x128xf32>
    %c0_3 = arith.constant 0 : index
    %c0_4 = arith.constant 0 : index
    %4 = vector.load %arg3[%c0_3, %c0_4] : memref<1x128xf32, #tpu.memory_space<vmem>>, vector<1x128xf32>
    %5 = vector.broadcast %4 : vector<1x128xf32> to vector<2x128xf32>
    %6 = arith.addf %3, %5 : vector<2x128xf32>
    %7 = math.tanh %6 : vector<2x128xf32>
    %c0_5 = arith.constant 0 : index
    %c0_6 = arith.constant 0 : index
    %8 = vector.load %arg4[%c0_5, %c0_6] : memref<2x128xf32, #tpu.memory_space<vmem>>, vector<2x128xf32>
    tpu.vector_store %arg4[%c0_5, %c0_6], %7 {strides = array<i32>} : memref<2x128xf32, #tpu.memory_space<vmem>>, vector<2x128xf32>,
    return
  }
  func.func @transform_0(%arg0: i32) -> (i32, i32) {
    %c0_i32 = arith.constant 0 : i32
    %c0_i32_0 = arith.constant 0 : i32
    return %arg0, %c0_i32 : i32, i32
  }
  func.func @transform_1(%arg0: i32) -> (i32, i32) {
    %c0_i32 = arith.constant 0 : i32
    %c0_i32_0 = arith.constant 0 : i32
    %c0_i32_1 = arith.constant 0 : i32
    return %c0_i32, %c0_i32_0 : i32, i32
  }
  func.func @transform_2(%arg0: i32) -> (i32, i32) {
    %c0_i32 = arith.constant 0 : i32
    %c0_i32_0 = arith.constant 0 : i32
    %c0_i32_1 = arith.constant 0 : i32
    return %c0_i32, %c0_i32_0 : i32, i32
  }
  func.func @transform_3(%arg0: i32) -> (i32, i32) {
    %c0_i32 = arith.constant 0 : i32
    %c0_i32_0 = arith.constant 0 : i32
    return %arg0, %c0_i32 : i32, i32
  }
}

</mosaic_0001>

<llo_original>
// kernel: tpu_custom_call.1
$region0: #{tpu_custom_call.1}
  #allocation0 [shape = 'u32[]', space=smem, size = 0x4, offset = 0x4, fixed_abs, tag = 'smem constant byte address 0x4 - core index']
  #allocation1 [shape = 'u32[144,128]{1,0:T(1,128)}', space=vmem, size = 0x12000, scoped, tag = 'internal scratch']
  %s0 = inlined_call_operand.hbm [shape: f32[2,1024], index: 0, kind: input, shape index: {}]
  %s1 = inlined_call_operand.hbm [shape: bf16[128,128], index: 1, kind: input, shape index: {}]
  %s2 = inlined_call_operand.vmem [shape: f32[1,128], index: 2, kind: input, shape index: {}]
  %s3 = inlined_call_operand.hbm [shape: f32[2,128], index: 3, kind: output, shape index: {}]
  %s4 = sld [smem:[#allocation0]]
  $region30: #{tpu_custom_call.1} parent=0
    _
  %s6 = ssub.s32 1, %s4
  %s7 = scalar_select 0, %s6, %s4
  $region1: #{tpu_custom_call.1} parent=0
    #allocation2 [shape = 'u8[1024]{0}', space=vmem, size = 0x400, scoped, tag = 'input window, operand 0, single buffered']
    #allocation3 [shape = 's32[1]{0}', space=sflag, size = 0x4, scoped, tag = 'scoped memory for tpu_custom_call.1']
    #allocation4 [shape = 's32[1]{0}', space=sflag, size = 0x4, scoped, tag = 'scoped memory for tpu_custom_call.1']
    #allocation5 [shape = 'u8[32768]{0}', space=vmem, size = 0x8000, scoped, tag = 'input window, operand 1, single buffered']
    #allocation6 [shape = 's32[1]{0}', space=sflag, size = 0x4, scoped, tag = 'scoped memory for tpu_custom_call.1']
    #allocation7 [shape = 'u8[1024]{0}', space=vmem, size = 0x400, scoped, tag = 'output window, operand 0, single buffered']
    %8 = vsyncpa [#allocation3], 0
    %9 = vsyncpa [#allocation6], 0
    %10 = vsyncpa [#allocation4], 0
    // Predicated region
    $region2: #{tpu_custom_call.1} parent=1 // pred_check
      _
    $region3: #{tpu_custom_call.1} parent=1 // pred_check_branch
      %12 = sbr.rel (0) target = $region5
    $region4: #{tpu_custom_call.1} parent=1 // pred_region
      %s14 = ssub.s32 32, 32
      %15 = vsyncadd [#allocation3], %s14
      %s17 = sshll.u32 [#allocation2], 4
      %s18 = int_to_ptr.vmem [resolvable:$true] %s17
      %20 = dma.hbm_to_vmem [thread:$0]  %s0, 32, %s18, [#allocation3]
    $region5: #{tpu_custom_call.1} parent=1 // pred_fallthru
      _
    // Predicated region
    $region6: #{tpu_custom_call.1} parent=1 // pred_check
      _
    $region7: #{tpu_custom_call.1} parent=1 // pred_check_branch
      %22 = sbr.rel (0) target = $region9
    $region8: #{tpu_custom_call.1} parent=1 // pred_region
      %s24 = ssub.s32 1024, 1024
      %25 = vsyncadd [#allocation6], %s24
      %s26 = sshll.u32 [#allocation5], 4
      %s27 = int_to_ptr.vmem [resolvable:$true] %s26
      %32 = dma.hbm_to_vmem [thread:$0]  %s1, 1024, %s27, [#allocation6], 64, 64, 4
    $region9: #{tpu_custom_call.1} parent=1 // pred_fallthru
      _
    // Predicated region
    $region10: #{tpu_custom_call.1} parent=1 // pred_check
      _
    $region11: #{tpu_custom_call.1} parent=1 // pred_check_branch
      %34 = sbr.rel (0) target = $region13
    $region12: #{tpu_custom_call.1} parent=1 // pred_region
      _
    $region13: #{tpu_custom_call.1} parent=1 // pred_fallthru
      _
    // Predicated region
    $region14: #{tpu_custom_call.1} parent=1 // pred_check
      _
    $region15: #{tpu_custom_call.1} parent=1 // pred_check_branch
      %36 = sbr.rel (0) target = $region17
    $region16: #{tpu_custom_call.1} parent=1 // pred_region
      %37 = dma.done [#allocation3], 32
    $region17: #{tpu_custom_call.1} parent=1 // pred_fallthru
      _
    // Predicated region
    $region18: #{tpu_custom_call.1} parent=1 // pred_check
      _
    $region19: #{tpu_custom_call.1} parent=1 // pred_check_branch
      %39 = sbr.rel (0) target = $region21
    $region20: #{tpu_custom_call.1} parent=1 // pred_region
      %40 = dma.done [#allocation6], 1024
    $region21: #{tpu_custom_call.1} parent=1 // pred_fallthru
      _
    %v42 = vld [vmem:[#allocation2] sm:$0x3]
    %v43 = vpack.c.bf16 %v42, %v42
    %v44 = vld [vmem:[#allocation5] sm:$0xf]
    %v45 = vld [vmem:[#allocation5 + $0x4] sm:$0xf]
    %v46 = vld [vmem:[#allocation5 + $0x8] sm:$0xf]
    %v47 = vld [vmem:[#allocation5 + $0xc] sm:$0xf]
    %v48 = vld [vmem:[#allocation5 + $0x10] sm:$0xf]
    %v49 = vld [vmem:[#allocation5 + $0x14] sm:$0xf]
    %v50 = vld [vmem:[#allocation5 + $0x18] sm:$0xf]
    %v51 = vld [vmem:[#allocation5 + $0x1c] sm:$0xf]
    %v52 = vld [vmem:[#allocation5 + $0x20] sm:$0xf]
    %v53 = vld [vmem:[#allocation5 + $0x24] sm:$0xf]
    %v54 = vld [vmem:[#allocation5 + $0x28] sm:$0xf]
    %v55 = vld [vmem:[#allocation5 + $0x2c] sm:$0xf]
    %v56 = vld [vmem:[#allocation5 + $0x30] sm:$0xf]
    %v57 = vld [vmem:[#allocation5 + $0x34] sm:$0xf]
    %v58 = vld [vmem:[#allocation5 + $0x38] sm:$0xf]
    %v59 = vld [vmem:[#allocation5 + $0x3c] sm:$0xf]
    %v60 = vld [vmem:[%s2] sm:$0x1]
    %v62 = vlaneseq
    %v63 = vshrl.u32 %v62, 7
    %v64 = vsub.s32 0, %v63
    %v65 = vrot.slane %v60, %v64
    %v83 = vunpack.c.l.b16 %v44
    %v84 = vunpack.c.l.b16 %v45
    %v85 = vunpack.c.l.b16 %v46
    %v86 = vunpack.c.l.b16 %v47
    %v87 = vunpack.c.l.b16 %v48
    %v88 = vunpack.c.l.b16 %v49
    %v89 = vunpack.c.l.b16 %v50
    %v90 = vunpack.c.l.b16 %v51
    %v91 = vunpack.c.l.b16 %v52
    %v92 = vunpack.c.l.b16 %v53
    %v93 = vunpack.c.l.b16 %v54
    %v94 = vunpack.c.l.b16 %v55
    %v95 = vunpack.c.l.b16 %v56
    %v96 = vunpack.c.l.b16 %v57
    %v97 = vunpack.c.l.b16 %v58
    %v98 = vunpack.c.l.b16 %v59
    %v99 = vpack.c.b16 %v84, %v83
    %v100 = vpack.c.b16 %v86, %v85
    %v101 = vpack.c.b16 %v88, %v87
    %v102 = vpack.c.b16 %v90, %v89
    %v103 = vpack.c.b16 %v92, %v91
    %v104 = vpack.c.b16 %v94, %v93
    %v105 = vpack.c.b16 %v96, %v95
    %v106 = vpack.c.b16 %v98, %v97
    %115 = vmatprep.subr.bf16.mxu0 0
    %116 = vmatpush1.bf16.msra.mxu0 %v99
    %117 = vmatprep.subr.bf16.mxu0 0
    %118 = vmatpush1.bf16.msra.mxu0 %v100
    %119 = vmatprep.subr.bf16.mxu0 0
    %120 = vmatpush1.bf16.msra.mxu0 %v101
    %121 = vmatprep.subr.bf16.mxu0 0
    %122 = vmatpush1.bf16.msra.mxu0 %v102
    %123 = vmatprep.subr.bf16.mxu0 0
    %124 = vmatpush1.bf16.msra.mxu0 %v103
    %125 = vmatprep.subr.bf16.mxu0 0
    %126 = vmatpush1.bf16.msra.mxu0 %v104
    %127 = vmatprep.subr.bf16.mxu0 0
    %128 = vmatpush1.bf16.msra.mxu0 %v105
    %129 = vmatprep.subr.bf16.mxu0 0
    %130 = vmatpush1.bf16.msra.mxu0 %v106
    %131 = vmatprep.subr.bf16.mxu0 0
    %132 = vmatpush1.bf16.msra.mxu0 0
    %133 = vmatprep.subr.bf16.mxu0 0
    %134 = vmatpush1.bf16.msra.mxu0 0
    %135 = vmatprep.subr.bf16.mxu0 0
    %136 = vmatpush1.bf16.msra.mxu0 0
    %137 = vmatprep.subr.bf16.mxu0 0
    %138 = vmatpush1.bf16.msra.mxu0 0
    %139 = vmatprep.subr.bf16.mxu0 0
    %140 = vmatpush1.bf16.msra.mxu0 0
    %141 = vmatprep.subr.bf16.mxu0 0
    %142 = vmatpush1.bf16.msra.mxu0 0
    %143 = vmatprep.subr.bf16.mxu0 0
    %144 = vmatpush1.bf16.msra.mxu0 0
    %145 = vmatprep.subr.bf16.mxu0 0
    %146 = vmatpush1.bf16.msra.mxu0 0
    %147 = vmatprep.mubr.bf16.mxu0 0
    %148 = vmatmul.mubr.bf16.gmra.mrb[0].mxu0 %v43
    %v149 = vpop.f32.mrb[0].mxu0
    %v150 = vadd.f32 %v65, %v149
    %v151 = vpop.f32.mrb[0].mxu0
    %v152 = vpop.f32.mrb[0].mxu0
    %v153 = vpop.f32.mrb[0].mxu0
    %154 = vdwg.mxu0
    %v155 = vtanh.pop %v150
    %156 = vst [vmem:[#allocation7] sm:$0x3] %v155
    // Predicated region
    $region22: #{tpu_custom_call.1} parent=1 // pred_check
      _
    $region23: #{tpu_custom_call.1} parent=1 // pred_check_branch
      %158 = sbr.rel (0) target = $region25
    $region24: #{tpu_custom_call.1} parent=1 // pred_region
      %s160 = ssub.s32 32, 32
      %161 = vsyncadd [#allocation4], %s160
      %s163 = sshll.u32 [#allocation7], 4
      %s164 = int_to_ptr.vmem [resolvable:$true] %s163
      %166 = dma.vmem_to_hbm [thread:$0]  %s164, 32, %s3, [#allocation4]
    $region25: #{tpu_custom_call.1} parent=1 // pred_fallthru
      _
    // Predicated region
    $region26: #{tpu_custom_call.1} parent=1 // pred_check
      _
    $region27: #{tpu_custom_call.1} parent=1 // pred_check_branch
      %168 = sbr.rel (0) target = $region29
    $region28: #{tpu_custom_call.1} parent=1 // pred_region
      %169 = dma.done [#allocation4], 32
    $region29: #{tpu_custom_call.1} parent=1 // pred_fallthru
      _
    %170 = vsyncpa [#allocation3], 1
    %171 = vsyncpa [#allocation6], 1
    %172 = vsyncpa [#allocation4], 1

</llo_original>
